<compile_context>
chip_gen: v6e
topology: v6e:2x2x1
jax: 0.10.0
libtpu: 0.0.40
codegen_flags: <defaults>
</compile_context>

<pallas_src>
import jax
import jax.numpy as jnp
from jax.experimental import pallas as pl
from jax.experimental.pallas import tpu as pltpu


def _vsn_kernel(x_ref, w1_ref, b1_ref, w2_ref, b2_ref, ww_ref, bw_ref,
                e_ref, s_ref, out_ref):
    """One row-tile of the VSN forward.

    x_ref  : (TN, F)      input rows (flattened batch*time)
    w1_ref : (F, F*H)     block-structured Linear(1,H) weights
    b1_ref : (1, F*H)     concatenated Linear(1,H) biases
    w2_ref : (F*H, F*H)   block-diagonal Linear(H,H) weights (in, out layout)
    b2_ref : (1, F*H)     concatenated Linear(H,H) biases
    ww_ref : (F*H, LW)    weight_layer weight, zero-padded to LW>=128 lanes
    bw_ref : (1, LW)      weight_layer bias, pad lanes hold -1e30
    e_ref  : (LW, F*H)    constant expand matrix: E[f, f*H + c] = 1
    s_ref  : (F*H, H)     constant sum matrix:    S[f*H + c, c] = 1
    out_ref: (TN, H)      selected output rows
    """
    x = x_ref[...]                                              # (TN, F)

    # Fused per-feature GRN: two lane-dense MXU matmuls against block weights.
    h = jnp.dot(x, w1_ref[...], preferred_element_type=jnp.float32)
    h = jnp.maximum(h + b1_ref[...], 0.0)                       # (TN, F*H)
    v = jnp.dot(h, w2_ref[...], preferred_element_type=jnp.float32)
    v = v + b2_ref[...]                                         # (TN, F*H)

    # weight_layer + softmax over feature dim on a full 128-lane vreg.
    # Pad lanes: ww columns are zero and bw carries -1e30, so exp() -> 0 there.
    logits = jnp.dot(v, ww_ref[...], preferred_element_type=jnp.float32)
    logits = logits + bw_ref[...]                               # (TN, LW)
    m = jnp.max(logits, axis=-1, keepdims=True)
    e = jnp.exp(logits - m)                                     # (TN, LW)
    denom = jnp.sum(e, axis=-1, keepdims=True)                  # (TN, 1)
    inv = pl.reciprocal(denom, approx=True)                     # EUP
    inv = inv * (2.0 - denom * inv)                             # one Newton step
    w = e * inv                                                 # softmax; pad lanes == 0

    # Selection epilogue on the (otherwise idle) MXU:
    #   w_exp[:, f*H + c] = w[:, f]            (broadcast softmax weights)
    #   out[:, c]         = sum_f w[:, f] * v[:, f*H + c]
    w_exp = jnp.dot(w, e_ref[...], preferred_element_type=jnp.float32)   # (TN, F*H)
    out_ref[...] = jnp.dot(w_exp * v, s_ref[...],
                           preferred_element_type=jnp.float32)           # (TN, H)


def fuse_params(params):
    """Build the block-structured / padded weights and constant epilogue
    matrices ONCE from the raw parameters."""
    w1, b1, w2, b2, ww, bw = params
    F, H = w1.shape
    FH = F * H
    LW = ((F + 127) // 128) * 128          # lane-padded logits width (>=128)

    eye_f = jnp.eye(F, dtype=jnp.float32)
    # W1_bd[i, j*H + b] = w1[i, b] if i == j else 0
    w1_bd = jnp.einsum("ij,ib->ijb", eye_f, w1).reshape(F, FH)
    b1_flat = b1.reshape(1, FH)
    # W2_bd[i*H + a, j*H + b] = w2[i, a, b] if i == j else 0
    w2_bd = jnp.einsum("ij,iab->iajb", eye_f, w2).reshape(FH, FH)
    b2_flat = b2.reshape(1, FH)

    ww_pad = jnp.pad(ww, ((0, 0), (0, LW - F)))
    bw_pad = jnp.pad(bw.reshape(1, F), ((0, 0), (0, LW - F)),
                     constant_values=-1e30)

    # Constant 0/1 matrices moving the weighted feature sum onto the MXU.
    e_mat = jnp.pad(jnp.repeat(eye_f, H, axis=1), ((0, LW - F), (0, 0)))   # (LW, FH)
    s_mat = jnp.tile(jnp.eye(H, dtype=jnp.float32), (F, 1))                # (FH, H)

    fused = (w1_bd, b1_flat, w2_bd, b2_flat, ww_pad, bw_pad, e_mat, s_mat)
    return fused, (F, H, FH, LW)


def _vmem_limit_bytes(tn):
    """Explicit scoped-VMEM budget for the larger row tile.

    Per step: x and out blocks are each lane-padded to 128 lanes of f32 and
    double-buffered (2 * 2 * TN*512 B); ~6 (TN,128) f32 intermediates
    (h, v, logits/e, w, w_exp, w_exp*v) live as compiler scratch; fused
    weights + margin ~2 MiB.  Clamped to [16 MiB, 48 MiB] so it stays well
    below physical VMEM on every generation (v7x: 64 MiB per TensorCore).
    """
    io = 2 * 2 * tn * 128 * 4
    scratch = 6 * tn * 128 * 4
    weights_and_margin = 2 * 1024 * 1024
    return int(min(max(io + scratch + weights_and_margin, 16 * 1024 * 1024),
                   48 * 1024 * 1024))


def _pick_tile(n_rows, tile_rows):
    """Sublane-aligned row tile.  Large tiles amortize the ~0.35us per-grid-
    step overhead; for small problems keep >= 2 grid steps so the 'parallel'
    axis can still shard across v7x's two TensorCores."""
    nr = ((n_rows + 7) // 8) * 8
    if nr <= tile_rows:
        tn = (((nr // 2) + 7) // 8) * 8 if nr >= 16 else nr
    else:
        tn = tile_rows
    tn = max(8, ((tn + 7) // 8) * 8)
    np_rows = ((n_rows + tn - 1) // tn) * tn
    return tn, np_rows


def simple_vsn_forward(x, fused, dims, *, tile_rows=2048):
    """x: (B, T, F) float32 -> (B, T, H) float32, using pre-fused weights."""
    w1_bd, b1_flat, w2_bd, b2_flat, ww_pad, bw_pad, e_mat, s_mat = fused
    F, H, FH, LW = dims

    B, T, Fx = x.shape
    assert Fx == F
    N = B * T
    xr = x.reshape(N, F).astype(jnp.float32)

    TN, Np = _pick_tile(N, tile_rows)
    if Np != N:
        xr = jnp.pad(xr, ((0, Np - N), (0, 0)))

    # Constant operands (index_map always (0,0)): single VMEM buffer is enough.
    const = dict(pipeline_mode=pl.Buffered(1))

    out = pl.pallas_call(
        _vsn_kernel,
        out_shape=jax.ShapeDtypeStruct((Np, H), jnp.float32),
        grid_spec=pltpu.PrefetchScalarGridSpec(
            num_scalar_prefetch=0,
            grid=(Np // TN,),
            in_specs=[
                pl.BlockSpec((TN, F), lambda i: (i, 0)),             # x rows
                pl.BlockSpec((F, FH), lambda i: (0, 0), **const),    # W1_bd
                pl.BlockSpec((1, FH), lambda i: (0, 0), **const),    # b1
                pl.BlockSpec((FH, FH), lambda i: (0, 0), **const),   # W2_bd
                pl.BlockSpec((1, FH), lambda i: (0, 0), **const),    # b2
                pl.BlockSpec((FH, LW), lambda i: (0, 0), **const),   # ww (padded)
                pl.BlockSpec((1, LW), lambda i: (0, 0), **const),    # bw (padded)
                pl.BlockSpec((LW, FH), lambda i: (0, 0), **const),   # expand E
                pl.BlockSpec((FH, H), lambda i: (0, 0), **const),    # sum S
            ],
            out_specs=pl.BlockSpec((TN, H), lambda i: (i, 0)),
        ),
        compiler_params=pltpu.CompilerParams(
            dimension_semantics=("parallel",),
            vmem_limit_bytes=_vmem_limit_bytes(TN)),
    )(xr, w1_bd, b1_flat, w2_bd, b2_flat, ww_pad, bw_pad, e_mat, s_mat)

    return out[:N].reshape(B, T, H)


def make_vsn_forward(params, *, tile_rows=2048):
    """Fuse/pad the weights ONCE and return a jitted forward over x only, so
    the einsum/pad constructions never re-run on the per-call path."""
    fused, dims = fuse_params(params)

    @jax.jit
    def fwd(x):
        return simple_vsn_forward(x, fused, dims, tile_rows=tile_rows)

    return fwd


def init_params(key, num_features, hidden_size):
    """Deterministic synthetic parameters (shapes match the PyTorch module).

    Linear weights are stored pre-transposed as (in, out) so the kernel can do
    x @ W directly; semantics match y = x @ W_pt.T + b.
    """
    ks = jax.random.split(key, 6)
    F, H = num_features, hidden_size
    w1 = jax.random.normal(ks[0], (F, H), jnp.float32) * 0.5
    b1 = jax.random.normal(ks[1], (F, H), jnp.float32) * 0.1
    w2 = jax.random.normal(ks[2], (F, H, H), jnp.float32) * (1.0 / jnp.sqrt(H))
    b2 = jax.random.normal(ks[3], (F, H), jnp.float32) * 0.1
    ww = jax.random.normal(ks[4], (F * H, F), jnp.float32) * (1.0 / jnp.sqrt(F * H))
    bw = jax.random.normal(ks[5], (1, F), jnp.float32) * 0.1
    return w1, b1, w2, b2, ww, bw


def vsn_reference(x, params):
    """Pure-JAX reference mirroring the PyTorch forward exactly."""
    w1, b1, w2, b2, ww, bw = params
    B, T, F = x.shape
    h = jnp.maximum(x[..., None] * w1 + b1, 0.0)                   # (B,T,F,H)
    v = jnp.einsum("btfh,fhg->btfg", h, w2) + b2                   # (B,T,F,H)
    flat = v.reshape(B, T, -1)                                     # (B,T,F*H)
    logits = flat @ ww + bw[0]                                     # (B,T,F)
    w = jax.nn.softmax(logits, axis=-1)
    return (v * w[..., None]).sum(axis=2)                          # (B,T,H)


if __name__ == "__main__":
    import numpy as np

    batch, time, num_features, hidden_size = 2, 8, 4, 32

    key = jax.random.PRNGKey(0)
    kx, kp = jax.random.split(key)
    x = jax.random.normal(kx, (batch, time, num_features), jnp.float32)
    params = init_params(kp, num_features, hidden_size)

    fwd = make_vsn_forward(params)          # fuse/pad weights once, jit forward
    out = jax.block_until_ready(fwd(x))

    ref = jax.block_until_ready(vsn_reference(x, params))
    np.testing.assert_allclose(np.asarray(out), np.asarray(ref),
                               rtol=1e-5, atol=1e-5)
    assert out.shape == (batch, time, hidden_size)
    print("KERNEL_OK")
</pallas_src>

<mosaic_0001>
module attributes {stable_mosaic.version = 11 : i64} {
  func.func @_vsn_kernel(%arg0: i32, %arg1: memref<8x4xf32, #tpu.memory_space<vmem>>, %arg2: memref<4x128xf32, #tpu.memory_space<vmem>>, %arg3: memref<1x128xf32, #tpu.memory_space<vmem>>, %arg4: memref<128x128xf32, #tpu.memory_space<vmem>>, %arg5: memref<1x128xf32, #tpu.memory_space<vmem>>, %arg6: memref<128x128xf32, #tpu.memory_space<vmem>>, %arg7: memref<1x128xf32, #tpu.memory_space<vmem>>, %arg8: memref<128x128xf32, #tpu.memory_space<vmem>>, %arg9: memref<128x32xf32, #tpu.memory_space<vmem>>, %arg10: memref<8x32xf32, #tpu.memory_space<vmem>>) attributes {dimension_semantics = [#tpu.dimension_semantics<parallel>], iteration_bounds = array<i64: 2>, scalar_prefetch = 0 : i64, scratch_operands = 0 : i64, tpu.core_type = #tpu.core_type<tc>, window_params = [{transform_indices = @transform_0, window_bounds = array<i64: 8, 4>}, {pipeline_mode = #tpu.pipeline_mode<synchronous>, transform_indices = @transform_1, window_bounds = array<i64: 4, 128>}, {pipeline_mode = #tpu.pipeline_mode<synchronous>, transform_indices = @transform_2, window_bounds = array<i64: 1, 128>}, {pipeline_mode = #tpu.pipeline_mode<synchronous>, transform_indices = @transform_3, window_bounds = array<i64: 128, 128>}, {pipeline_mode = #tpu.pipeline_mode<synchronous>, transform_indices = @transform_4, window_bounds = array<i64: 1, 128>}, {pipeline_mode = #tpu.pipeline_mode<synchronous>, transform_indices = @transform_5, window_bounds = array<i64: 128, 128>}, {pipeline_mode = #tpu.pipeline_mode<synchronous>, transform_indices = @transform_6, window_bounds = array<i64: 1, 128>}, {pipeline_mode = #tpu.pipeline_mode<synchronous>, transform_indices = @transform_7, window_bounds = array<i64: 128, 128>}, {pipeline_mode = #tpu.pipeline_mode<synchronous>, transform_indices = @transform_8, window_bounds = array<i64: 128, 32>}, {transform_indices = @transform_9, window_bounds = array<i64: 8, 32>}]} {
    %c0 = arith.constant 0 : index
    %c0_0 = arith.constant 0 : index
    %0 = vector.load %arg1[%c0, %c0_0] : memref<8x4xf32, #tpu.memory_space<vmem>>, vector<8x4xf32>
    %c0_1 = arith.constant 0 : index
    %c0_2 = arith.constant 0 : index
    %1 = vector.load %arg2[%c0_1, %c0_2] : memref<4x128xf32, #tpu.memory_space<vmem>>, vector<4x128xf32>
    %cst = arith.constant dense<0.000000e+00> : vector<8x128xf32>
    %2 = tpu.matmul %0, %1, %cst {dimension_numbers = #tpu.dot_dimension_numbers<[1], [0], [0], [1], [0, 0, 1, 1], [], []>} : vector<8x4xf32>, vector<4x128xf32>, vector<8x128xf32> -> vector<8x128xf32>
    %c0_3 = arith.constant 0 : index
    %c0_4 = arith.constant 0 : index
    %3 = vector.load %arg3[%c0_3, %c0_4] : memref<1x128xf32, #tpu.memory_space<vmem>>, vector<1x128xf32>
    %4 = vector.broadcast %3 : vector<1x128xf32> to vector<8x128xf32>
    %5 = arith.addf %2, %4 : vector<8x128xf32>
    %cst_5 = arith.constant 0.000000e+00 : f32
    %6 = vector.broadcast %cst_5 : f32 to vector<8x128xf32>
    %7 = arith.maximumf %5, %6 : vector<8x128xf32>
    %c0_6 = arith.constant 0 : index
    %c0_7 = arith.constant 0 : index
    %8 = vector.load %arg4[%c0_6, %c0_7] : memref<128x128xf32, #tpu.memory_space<vmem>>, vector<128x128xf32>
    %cst_8 = arith.constant dense<0.000000e+00> : vector<8x128xf32>
    %9 = tpu.matmul %7, %8, %cst_8 {dimension_numbers = #tpu.dot_dimension_numbers<[1], [0], [0], [1], [0, 0, 1, 1], [], []>} : vector<8x128xf32>, vector<128x128xf32>, vector<8x128xf32> -> vector<8x128xf32>
    %c0_9 = arith.constant 0 : index
    %c0_10 = arith.constant 0 : index
    %10 = vector.load %arg5[%c0_9, %c0_10] : memref<1x128xf32, #tpu.memory_space<vmem>>, vector<1x128xf32>
    %11 = vector.broadcast %10 : vector<1x128xf32> to vector<8x128xf32>
    %12 = arith.addf %9, %11 : vector<8x128xf32>
    %c0_11 = arith.constant 0 : index
    %c0_12 = arith.constant 0 : index
    %13 = vector.load %arg6[%c0_11, %c0_12] : memref<128x128xf32, #tpu.memory_space<vmem>>, vector<128x128xf32>
    %cst_13 = arith.constant dense<0.000000e+00> : vector<8x128xf32>
    %14 = tpu.matmul %12, %13, %cst_13 {dimension_numbers = #tpu.dot_dimension_numbers<[1], [0], [0], [1], [0, 0, 1, 1], [], []>} : vector<8x128xf32>, vector<128x128xf32>, vector<8x128xf32> -> vector<8x128xf32>
    %c0_14 = arith.constant 0 : index
    %c0_15 = arith.constant 0 : index
    %15 = vector.load %arg7[%c0_14, %c0_15] : memref<1x128xf32, #tpu.memory_space<vmem>>, vector<1x128xf32>
    %16 = vector.broadcast %15 : vector<1x128xf32> to vector<8x128xf32>
    %17 = arith.addf %14, %16 : vector<8x128xf32>
    %cst_16 = arith.constant dense<0xFF800000> : vector<8xf32>
    %18 = vector.multi_reduction <maximumf>, %17, %cst_16 [1] : vector<8x128xf32> to vector<8xf32>
    %19 = vector.shape_cast %18 : vector<8xf32> to vector<8x1xf32>
    %20 = vector.broadcast %19 : vector<8x1xf32> to vector<8x128xf32>
    %21 = arith.subf %17, %20 : vector<8x128xf32>
    %22 = math.exp %21 : vector<8x128xf32>
    %cst_17 = arith.constant dense<0.000000e+00> : vector<8xf32>
    %23 = vector.multi_reduction <add>, %22, %cst_17 [1] : vector<8x128xf32> to vector<8xf32>
    %24 = vector.shape_cast %23 : vector<8xf32> to vector<8x1xf32>
    %25 = tpu.reciprocal %24 {approx = true} : vector<8x1xf32> -> vector<8x1xf32>
    %26 = arith.mulf %24, %25 : vector<8x1xf32>
    %cst_18 = arith.constant 2.000000e+00 : f32
    %27 = vector.broadcast %cst_18 : f32 to vector<8x1xf32>
    %28 = arith.subf %27, %26 : vector<8x1xf32>
    %29 = arith.mulf %25, %28 : vector<8x1xf32>
    %30 = vector.broadcast %29 : vector<8x1xf32> to vector<8x128xf32>
    %31 = arith.mulf %22, %30 : vector<8x128xf32>
    %c0_19 = arith.constant 0 : index
    %c0_20 = arith.constant 0 : index
    %32 = vector.load %arg8[%c0_19, %c0_20] : memref<128x128xf32, #tpu.memory_space<vmem>>, vector<128x128xf32>
    %cst_21 = arith.constant dense<0.000000e+00> : vector<8x128xf32>
    %33 = tpu.matmul %31, %32, %cst_21 {dimension_numbers = #tpu.dot_dimension_numbers<[1], [0], [0], [1], [0, 0, 1, 1], [], []>} : vector<8x128xf32>, vector<128x128xf32>, vector<8x128xf32> -> vector<8x128xf32>
    %34 = arith.mulf %33, %12 : vector<8x128xf32>
    %c0_22 = arith.constant 0 : index
    %c0_23 = arith.constant 0 : index
    %35 = vector.load %arg9[%c0_22, %c0_23] : memref<128x32xf32, #tpu.memory_space<vmem>>, vector<128x32xf32>
    %cst_24 = arith.constant dense<0.000000e+00> : vector<8x32xf32>
    %36 = tpu.matmul %34, %35, %cst_24 {dimension_numbers = #tpu.dot_dimension_numbers<[1], [0], [0], [1], [0, 0, 1, 1], [], []>} : vector<8x128xf32>, vector<128x32xf32>, vector<8x32xf32> -> vector<8x32xf32>
    %c0_25 = arith.constant 0 : index
    %c0_26 = arith.constant 0 : index
    %37 = vector.load %arg10[%c0_25, %c0_26] : memref<8x32xf32, #tpu.memory_space<vmem>>, vector<8x32xf32>
    tpu.vector_store %arg10[%c0_25, %c0_26], %36 {strides = array<i32>} : memref<8x32xf32, #tpu.memory_space<vmem>>, vector<8x32xf32>,
    return
  }
  func.func @transform_0(%arg0: i32) -> (i32, i32) {
    %c0_i32 = arith.constant 0 : i32
    %c0_i32_0 = arith.constant 0 : i32
    return %arg0, %c0_i32 : i32, i32
  }
  func.func @transform_1(%arg0: i32) -> (i32, i32) {
    %c0_i32 = arith.constant 0 : i32
    %c0_i32_0 = arith.constant 0 : i32
    %c0_i32_1 = arith.constant 0 : i32
    return %c0_i32, %c0_i32_0 : i32, i32
  }
  func.func @transform_2(%arg0: i32) -> (i32, i32) {
    %c0_i32 = arith.constant 0 : i32
    %c0_i32_0 = arith.constant 0 : i32
    %c0_i32_1 = arith.constant 0 : i32
    return %c0_i32, %c0_i32_0 : i32, i32
  }
  func.func @transform_3(%arg0: i32) -> (i32, i32) {
    %c0_i32 = arith.constant 0 : i32
    %c0_i32_0 = arith.constant 0 : i32
    %c0_i32_1 = arith.constant 0 : i32
    return %c0_i32, %c0_i32_0 : i32, i32
  }
  func.func @transform_4(%arg0: i32) -> (i32, i32) {
    %c0_i32 = arith.constant 0 : i32
    %c0_i32_0 = arith.constant 0 : i32
    %c0_i32_1 = arith.constant 0 : i32
    return %c0_i32, %c0_i32_0 : i32, i32
  }
  func.func @transform_5(%arg0: i32) -> (i32, i32) {
    %c0_i32 = arith.constant 0 : i32
    %c0_i32_0 = arith.constant 0 : i32
    %c0_i32_1 = arith.constant 0 : i32
    return %c0_i32, %c0_i32_0 : i32, i32
  }
  func.func @transform_6(%arg0: i32) -> (i32, i32) {
    %c0_i32 = arith.constant 0 : i32
    %c0_i32_0 = arith.constant 0 : i32
    %c0_i32_1 = arith.constant 0 : i32
    return %c0_i32, %c0_i32_0 : i32, i32
  }
  func.func @transform_7(%arg0: i32) -> (i32, i32) {
    %c0_i32 = arith.constant 0 : i32
    %c0_i32_0 = arith.constant 0 : i32
    %c0_i32_1 = arith.constant 0 : i32
    return %c0_i32, %c0_i32_0 : i32, i32
  }
  func.func @transform_8(%arg0: i32) -> (i32, i32) {
    %c0_i32 = arith.constant 0 : i32
    %c0_i32_0 = arith.constant 0 : i32
    %c0_i32_1 = arith.constant 0 : i32
    return %c0_i32, %c0_i32_0 : i32, i32
  }
  func.func @transform_9(%arg0: i32) -> (i32, i32) {
    %c0_i32 = arith.constant 0 : i32
    %c0_i32_0 = arith.constant 0 : i32
    return %arg0, %c0_i32 : i32, i32
  }
}

</mosaic_0001>

<llo_original>
// kernel: fwd.1
$region0: #{fwd.1}
  #allocation0 [shape = 'u32[]', space=smem, size = 0x4, offset = 0x4, fixed_abs, tag = 'smem constant byte address 0x4 - core index']
  #allocation1 [shape = 'u32[144,128]{1,0:T(1,128)}', space=vmem, size = 0x12000, scoped, tag = 'internal scratch']
  %s0 = inlined_call_operand.vmem [shape: f32[16,4], index: 0, kind: input, shape index: {}]
  %s1 = inlined_call_operand.vmem [shape: f32[4,128], index: 1, kind: input, shape index: {}]
  %s2 = inlined_call_operand.vmem [shape: f32[1,128], index: 2, kind: input, shape index: {}]
  %s3 = inlined_call_operand.hbm [shape: f32[128,128], index: 3, kind: input, shape index: {}]
  %s4 = inlined_call_operand.vmem [shape: f32[1,128], index: 4, kind: input, shape index: {}]
  %s5 = inlined_call_operand.hbm [shape: f32[128,128], index: 5, kind: input, shape index: {}]
  %s6 = inlined_call_operand.vmem [shape: f32[1,128], index: 6, kind: input, shape index: {}]
  %s7 = inlined_call_operand.hbm [shape: f32[128,128], index: 7, kind: input, shape index: {}]
  %s8 = inlined_call_operand.hbm [shape: f32[128,32], index: 8, kind: input, shape index: {}]
  %s9 = inlined_call_operand.hbm [shape: f32[16,32], index: 9, kind: output, shape index: {}]
  %s10 = sld [smem:[#allocation0]]
  $region85: #{fwd.1} parent=0
    _
  %s12 = ssub.s32 1, %s10
  %s13 = scalar_select 0, %s12, %s10
  $region1: #{fwd.1} parent=0
    #allocation2 [shape = 'u8[65536]{0}', space=vmem, size = 0x10000, scoped, tag = 'input window, operand 3, single buffered']
    #allocation3 [shape = 's32[2]{0}', space=sflag, size = 0x8, scoped, tag = 'scoped memory for fwd.1']
    #allocation4 [shape = 's32[2]{0}', space=sflag, size = 0x8, scoped, tag = 'scoped memory for fwd.1']
    #allocation5 [shape = 'u8[65536]{0}', space=vmem, size = 0x10000, scoped, tag = 'input window, operand 5, single buffered']
    #allocation6 [shape = 's32[1]{0}', space=sflag, size = 0x4, scoped, tag = 'scoped memory for fwd.1']
    #allocation7 [shape = 'u8[65536]{0}', space=vmem, size = 0x10000, scoped, tag = 'input window, operand 7, single buffered']
    #allocation8 [shape = 'u8[65536]{0}', space=vmem, size = 0x10000, scoped, tag = 'input window, operand 8, single buffered']
    #allocation9 [shape = 's32[1]{0}', space=sflag, size = 0x4, scoped, tag = 'scoped memory for fwd.1']
    #allocation10 [shape = 'u8[8192]{0}', space=vmem, size = 0x2000, scoped, tag = 'output window, operand 0']
    %14 = vsyncpa [#allocation3], 0
    %15 = vsyncpa [#allocation6], 0
    %16 = vsyncpa [#allocation9], 0
    %17 = vsyncpa [#allocation4], 0
    %s18 = scalar_lea.sflag [#allocation4], 1
    %19 = vsyncpa %s18, 0
    loop: start=0, step=1, limit=4
    $region2: #{fwd.1} parent=1 // loop_pre_header
      _
    $region3: #{fwd.1} parent=1 // loop_header
      %s21 = sphi 0, %s25
      %p22 = scmp.ge.s32.totalorder %s21, 4
      %s31 = sphi 0, %s33
      %s34 = sphi 0, %s31
      %s35 = sphi 0, %s34
      %s51 = sphi 0, %s35
      %s55 = sphi 0, %s55
      %s57 = sphi 0, %s55
      %s58 = sphi 0, %s57
      %s72 = sphi 0, %s58
      %s76 = sphi 0, %s76
      %s78 = sphi 0, %s76
      %s79 = sphi 0, %s78
      %s93 = sphi 0, %s79
      %s97 = sphi 0, %s97
      %s99 = sphi 0, %s97
      %s100 = sphi 0, %s99
      %s114 = sphi 0, %s100
      %s118 = sphi 0, %s118
      %s120 = sphi 0, %s118
      %s121 = sphi 0, %s120
      %s135 = sphi 0, %s121
      %s139 = sphi 0, %s139
      %s141 = sphi 0, %s139
      %s142 = sphi 0, %s141
      %s156 = sphi 0, %s142
      %s160 = sphi 0, %s160
      %s162 = sphi 0, %s160
      %s163 = sphi 0, %s162
      %s177 = sphi 0, %s163
      %s181 = sphi 0, %s181
      %s183 = sphi 0, %s181
      %s184 = sphi 0, %s183
      %s198 = sphi 0, %s184
      %s202 = sphi 0, %s202
      %s204 = sphi 0, %s202
      %s205 = sphi 0, %s204
      %s219 = sphi 0, %s205
      %s225 = sphi 0, %s227
      %s228 = sphi 0, %s225
      %s229 = sphi 0, %s228
      %s245 = sphi 0, %s229
    $region4: #{fwd.1} parent=1 // loop_header_branch
      %24 = sbr.rel (%p22) target = $region8
    $region5: #{fwd.1} parent=1 // loop_body
      %s26 = ssub.s32 %s21, 1
      %s27 = ssub.s32 %s21, 2
      %s28 = sadd.s32 %s21, 1
      %s29 = ssub.s32 %s21, %s28
      %p30 = scmp.eq.s32.totalorder %s29, 0
      %s32 = sadd.s32 %s31, 1
      %s33 = scalar_select %p30, %s31, %s32
      %p36 = pneg %p30
      %p37 = scmp.eq.s32.totalorder %s21, 1
      %p38 = por %p36, %p37
      %p39 = scmp.ne.s32.totalorder %s31, %s34
      %p40 = scmp.eq.s32.totalorder %s21, 0
      %p41 = por %p39, %p40
      %p42 = scmp.ne.s32.totalorder %s31, %s34
      %p43 = scmp.eq.s32.totalorder %s26, 1
      %p44 = por %p42, %p43
      %p45 = scmp.ne.s32.totalorder %s34, %s35
      %p46 = scmp.eq.s32.totalorder %s26, 0
      %p47 = por %p45, %p46
      %p48 = scmp.ne.s32.totalorder %s34, %s35
      %p49 = scmp.eq.s32.totalorder %s27, 1
      %p50 = por %p48, %p49
      %p52 = scmp.ne.s32.totalorder %s35, %s51
      %p53 = scmp.eq.s32.totalorder %s27, 0
      %p54 = por %p52, %p53
      %s56 = sadd.s32 %s55, 1
      %p59 = scmp.eq.s32.totalorder %s21, 1
      %p60 = scmp.ne.s32.totalorder %s55, %s57
      %p61 = scmp.eq.s32.totalorder %s21, 0
      %p62 = por %p60, %p61
      %p63 = scmp.ne.s32.totalorder %s55, %s57
      %p64 = scmp.eq.s32.totalorder %s26, 1
      %p65 = por %p63, %p64
      %p66 = scmp.ne.s32.totalorder %s57, %s58
      %p67 = scmp.eq.s32.totalorder %s26, 0
      %p68 = por %p66, %p67
      %p69 = scmp.ne.s32.totalorder %s57, %s58
      %p70 = scmp.eq.s32.totalorder %s27, 1
      %p71 = por %p69, %p70
      %p73 = scmp.ne.s32.totalorder %s58, %s72
      %p74 = scmp.eq.s32.totalorder %s27, 0
      %p75 = por %p73, %p74
      %s77 = sadd.s32 %s76, 1
      %p80 = scmp.eq.s32.totalorder %s21, 1
      %p81 = scmp.ne.s32.totalorder %s76, %s78
      %p82 = scmp.eq.s32.totalorder %s21, 0
      %p83 = por %p81, %p82
      %p84 = scmp.ne.s32.totalorder %s76, %s78
      %p85 = scmp.eq.s32.totalorder %s26, 1
      %p86 = por %p84, %p85
      %p87 = scmp.ne.s32.totalorder %s78, %s79
      %p88 = scmp.eq.s32.totalorder %s26, 0
      %p89 = por %p87, %p88
      %p90 = scmp.ne.s32.totalorder %s78, %s79
      %p91 = scmp.eq.s32.totalorder %s27, 1
      %p92 = por %p90, %p91
      %p94 = scmp.ne.s32.totalorder %s79, %s93
      %p95 = scmp.eq.s32.totalorder %s27, 0
      %p96 = por %p94, %p95
      %s98 = sadd.s32 %s97, 1
      %p101 = scmp.eq.s32.totalorder %s21, 1
      %p102 = scmp.ne.s32.totalorder %s97, %s99
      %p103 = scmp.eq.s32.totalorder %s21, 0
      %p104 = por %p102, %p103
      %p105 = scmp.ne.s32.totalorder %s97, %s99
      %p106 = scmp.eq.s32.totalorder %s26, 1
      %p107 = por %p105, %p106
      %p108 = scmp.ne.s32.totalorder %s99, %s100
      %p109 = scmp.eq.s32.totalorder %s26, 0
      %p110 = por %p108, %p109
      %p111 = scmp.ne.s32.totalorder %s99, %s100
      %p112 = scmp.eq.s32.totalorder %s27, 1
      %p113 = por %p111, %p112
      %p115 = scmp.ne.s32.totalorder %s100, %s114
      %p116 = scmp.eq.s32.totalorder %s27, 0
      %p117 = por %p115, %p116
      %s119 = sadd.s32 %s118, 1
      %p122 = scmp.eq.s32.totalorder %s21, 1
      %p123 = scmp.ne.s32.totalorder %s118, %s120
      %p124 = scmp.eq.s32.totalorder %s21, 0
      %p125 = por %p123, %p124
      %p126 = scmp.ne.s32.totalorder %s118, %s120
      %p127 = scmp.eq.s32.totalorder %s26, 1
      %p128 = por %p126, %p127
      %p129 = scmp.ne.s32.totalorder %s120, %s121
      %p130 = scmp.eq.s32.totalorder %s26, 0
      %p131 = por %p129, %p130
      %p132 = scmp.ne.s32.totalorder %s120, %s121
      %p133 = scmp.eq.s32.totalorder %s27, 1
      %p134 = por %p132, %p133
      %p136 = scmp.ne.s32.totalorder %s121, %s135
      %p137 = scmp.eq.s32.totalorder %s27, 0
      %p138 = por %p136, %p137
      %s140 = sadd.s32 %s139, 1
      %p143 = scmp.eq.s32.totalorder %s21, 1
      %p144 = scmp.ne.s32.totalorder %s139, %s141
      %p145 = scmp.eq.s32.totalorder %s21, 0
      %p146 = por %p144, %p145
      %p147 = scmp.ne.s32.totalorder %s139, %s141
      %p148 = scmp.eq.s32.totalorder %s26, 1
      %p149 = por %p147, %p148
      %p150 = scmp.ne.s32.totalorder %s141, %s142
      %p151 = scmp.eq.s32.totalorder %s26, 0
      %p152 = por %p150, %p151
      %p153 = scmp.ne.s32.totalorder %s141, %s142
      %p154 = scmp.eq.s32.totalorder %s27, 1
      %p155 = por %p153, %p154
      %p157 = scmp.ne.s32.totalorder %s142, %s156
      %p158 = scmp.eq.s32.totalorder %s27, 0
      %p159 = por %p157, %p158
      %s161 = sadd.s32 %s160, 1
      %p164 = scmp.eq.s32.totalorder %s21, 1
      %p165 = scmp.ne.s32.totalorder %s160, %s162
      %p166 = scmp.eq.s32.totalorder %s21, 0
      %p167 = por %p165, %p166
      %p168 = scmp.ne.s32.totalorder %s160, %s162
      %p169 = scmp.eq.s32.totalorder %s26, 1
      %p170 = por %p168, %p169
      %p171 = scmp.ne.s32.totalorder %s162, %s163
      %p172 = scmp.eq.s32.totalorder %s26, 0
      %p173 = por %p171, %p172
      %p174 = scmp.ne.s32.totalorder %s162, %s163
      %p175 = scmp.eq.s32.totalorder %s27, 1
      %p176 = por %p174, %p175
      %p178 = scmp.ne.s32.totalorder %s163, %s177
      %p179 = scmp.eq.s32.totalorder %s27, 0
      %p180 = por %p178, %p179
      %s182 = sadd.s32 %s181, 1
      %p185 = scmp.eq.s32.totalorder %s21, 1
      %p186 = scmp.ne.s32.totalorder %s181, %s183
      %p187 = scmp.eq.s32.totalorder %s21, 0
      %p188 = por %p186, %p187
      %p189 = scmp.ne.s32.totalorder %s181, %s183
      %p190 = scmp.eq.s32.totalorder %s26, 1
      %p191 = por %p189, %p190
      %p192 = scmp.ne.s32.totalorder %s183, %s184
      %p193 = scmp.eq.s32.totalorder %s26, 0
      %p194 = por %p192, %p193
      %p195 = scmp.ne.s32.totalorder %s183, %s184
      %p196 = scmp.eq.s32.totalorder %s27, 1
      %p197 = por %p195, %p196
      %p199 = scmp.ne.s32.totalorder %s184, %s198
      %p200 = scmp.eq.s32.totalorder %s27, 0
      %p201 = por %p199, %p200
      %s203 = sadd.s32 %s202, 1
      %p206 = scmp.eq.s32.totalorder %s21, 1
      %p207 = scmp.ne.s32.totalorder %s202, %s204
      %p208 = scmp.eq.s32.totalorder %s21, 0
      %p209 = por %p207, %p208
      %p210 = scmp.ne.s32.totalorder %s202, %s204
      %p211 = scmp.eq.s32.totalorder %s26, 1
      %p212 = por %p210, %p211
      %p213 = scmp.ne.s32.totalorder %s204, %s205
      %p214 = scmp.eq.s32.totalorder %s26, 0
      %p215 = por %p213, %p214
      %p216 = scmp.ne.s32.totalorder %s204, %s205
      %p217 = scmp.eq.s32.totalorder %s27, 1
      %p218 = por %p216, %p217
      %p220 = scmp.ne.s32.totalorder %s205, %s219
      %p221 = scmp.eq.s32.totalorder %s27, 0
      %p222 = por %p220, %p221
      %s223 = ssub.s32 %s21, %s28
      %p224 = scmp.eq.s32.totalorder %s223, 0
      %s226 = sadd.s32 %s225, 1
      %s227 = scalar_select %p224, %s225, %s226
      %p230 = pneg %p224
      %p231 = scmp.eq.s32.totalorder %s21, 1
      %p232 = por %p230, %p231
      %p233 = scmp.ne.s32.totalorder %s225, %s228
      %p234 = scmp.eq.s32.totalorder %s21, 0
      %p235 = por %p233, %p234
      %p236 = scmp.ne.s32.totalorder %s225, %s228
      %p237 = scmp.eq.s32.totalorder %s26, 1
      %p238 = por %p236, %p237
      %p239 = scmp.ne.s32.totalorder %s228, %s229
      %p240 = scmp.eq.s32.totalorder %s26, 0
      %p241 = por %p239, %p240
      %p242 = scmp.ne.s32.totalorder %s228, %s229
      %p243 = scmp.eq.s32.totalorder %s27, 1
      %p244 = por %p242, %p243
      %p246 = scmp.ne.s32.totalorder %s229, %s245
      %p247 = scmp.eq.s32.totalorder %s27, 0
      %p248 = por %p246, %p247
      %p249 = scmp.le.s32.totalorder 1, %s21
      %p250 = scmp.lt.s32.totalorder %s21, 3
      %p251 = pnand %p249, %p250
      %p252 = pneg %p251
      // Predicated region
      $region9: #{fwd.1} parent=5 // pred_check
        _
      $region10: #{fwd.1} parent=5 // pred_check_branch
        %254 = sbr.rel (%p251) target = $region12
      $region11: #{fwd.1} parent=5 // pred_region
        %s255 = ssub.s32 %s21, 1
        // Predicated region
        $region13: #{fwd.1} parent=11 // pred_check
          %p256 = pneg %p68
        $region14: #{fwd.1} parent=11 // pred_check_branch
          %258 = sbr.rel (%p256) target = $region16
        $region15: #{fwd.1} parent=11 // pred_region
          _
        $region16: #{fwd.1} parent=11 // pred_fallthru
          _
        // Predicated region
        $region17: #{fwd.1} parent=11 // pred_check
          %p259 = pneg %p89
        $region18: #{fwd.1} parent=11 // pred_check_branch
          %261 = sbr.rel (%p259) target = $region20
        $region19: #{fwd.1} parent=11 // pred_region
          _
        $region20: #{fwd.1} parent=11 // pred_fallthru
          _
        // Predicated region
        $region21: #{fwd.1} parent=11 // pred_check
          %p262 = pneg %p110
        $region22: #{fwd.1} parent=11 // pred_check_branch
          %264 = sbr.rel (%p262) target = $region24
        $region23: #{fwd.1} parent=11 // pred_region
          %s266 = ssub.s32 2048, 2048
          %267 = vsyncadd [#allocation3], %s266
          %s268 = sshll.u32 [#allocation2], 4
          %s269 = int_to_ptr.vmem [resolvable:$true] %s268
          %274 = dma.hbm_to_vmem [thread:$0]  %s3, 2048, %s269, [#allocation3], 128, 128, 8
        $region24: #{fwd.1} parent=11 // pred_fallthru
          _
        // Predicated region
        $region25: #{fwd.1} parent=11 // pred_check
          %p275 = pneg %p131
        $region26: #{fwd.1} parent=11 // pred_check_branch
          %277 = sbr.rel (%p275) target = $region28
        $region27: #{fwd.1} parent=11 // pred_region
          _
        $region28: #{fwd.1} parent=11 // pred_fallthru
          _
        // Predicated region
        $region29: #{fwd.1} parent=11 // pred_check
          %p278 = pneg %p152
        $region30: #{fwd.1} parent=11 // pred_check_branch
          %280 = sbr.rel (%p278) target = $region32
        $region31: #{fwd.1} parent=11 // pred_region
          %s282 = ssub.s32 2048, 2048
          %283 = vsyncadd [#allocation6], %s282
          %s284 = sshll.u32 [#allocation5], 4
          %s285 = int_to_ptr.vmem [resolvable:$true] %s284
          %290 = dma.hbm_to_vmem [thread:$0]  %s5, 2048, %s285, [#allocation6], 128, 128, 8
        $region32: #{fwd.1} parent=11 // pred_fallthru
          _
        // Predicated region
        $region33: #{fwd.1} parent=11 // pred_check
          %p291 = pneg %p173
        $region34: #{fwd.1} parent=11 // pred_check_branch
          %293 = sbr.rel (%p291) target = $region36
        $region35: #{fwd.1} parent=11 // pred_region
          _
        $region36: #{fwd.1} parent=11 // pred_fallthru
          _
        // Predicated region
        $region37: #{fwd.1} parent=11 // pred_check
          %p294 = pneg %p194
        $region38: #{fwd.1} parent=11 // pred_check_branch
          %296 = sbr.rel (%p294) target = $region40
        $region39: #{fwd.1} parent=11 // pred_region
          %s298 = ssub.s32 2048, 2048
          %299 = vsyncadd [#allocation6], %s298
          %s300 = sshll.u32 [#allocation7], 4
          %s301 = int_to_ptr.vmem [resolvable:$true] %s300
          %306 = dma.hbm_to_vmem [thread:$0]  %s7, 2048, %s301, [#allocation6], 128, 128, 8
        $region40: #{fwd.1} parent=11 // pred_fallthru
          _
        // Predicated region
        $region41: #{fwd.1} parent=11 // pred_check
          %p307 = pneg %p215
        $region42: #{fwd.1} parent=11 // pred_check_branch
          %309 = sbr.rel (%p307) target = $region44
        $region43: #{fwd.1} parent=11 // pred_region
          %s311 = ssub.s32 2048, 2048
          %312 = vsyncadd [#allocation9], %s311
          %s313 = sshll.u32 [#allocation8], 4
          %s314 = int_to_ptr.vmem [resolvable:$true] %s313
          %319 = dma.hbm_to_vmem [thread:$0]  %s8, 2048, %s314, [#allocation9], 128, 128, 8
        $region44: #{fwd.1} parent=11 // pred_fallthru
          _
      $region12: #{fwd.1} parent=5 // pred_fallthru
        _
      %p320 = scmp.lt.s32.totalorder %s21, 2
      // Predicated region
      $region45: #{fwd.1} parent=5 // pred_check
        %p321 = pneg %p320
      $region46: #{fwd.1} parent=5 // pred_check_branch
        %323 = sbr.rel (%p321) target = $region48
      $region47: #{fwd.1} parent=5 // pred_region
        // Predicated region
        $region49: #{fwd.1} parent=47 // pred_check
          %p324 = pneg %p41
        $region50: #{fwd.1} parent=47 // pred_check_branch
          %326 = sbr.rel (%p324) target = $region52
        $region51: #{fwd.1} parent=47 // pred_region
          %p327 = scmp.lt.s32.totalorder %s21, 1
          %s328 = scalar_select %p327, %s21, 1
          %s329 = smul.addr %s328, 8
          %s330 = scalar_lea.vmem %s0, %s329
        $region52: #{fwd.1} parent=47 // pred_fallthru
          _
      $region48: #{fwd.1} parent=5 // pred_fallthru
        _
      %p331 = scmp.le.s32.totalorder 1, %s21
      %p332 = scmp.lt.s32.totalorder %s21, 3
      %p333 = pnand %p331, %p332
      %p334 = pneg %p333
      // Predicated region
      $region53: #{fwd.1} parent=5 // pred_check
        _
      $region54: #{fwd.1} parent=5 // pred_check_branch
        %336 = sbr.rel (%p333) target = $region56
      $region55: #{fwd.1} parent=5 // pred_region
        %s337 = ssub.s32 %s21, 1
        // Predicated region
        $region57: #{fwd.1} parent=55 // pred_check
          %p338 = pneg %p110
        $region58: #{fwd.1} parent=55 // pred_check_branch
          %340 = sbr.rel (%p338) target = $region60
        $region59: #{fwd.1} parent=55 // pred_region
          %341 = dma.done [#allocation3], 2048
        $region60: #{fwd.1} parent=55 // pred_fallthru
          _
        // Predicated region
        $region61: #{fwd.1} parent=55 // pred_check
          %p342 = pneg %p152
        $region62: #{fwd.1} parent=55 // pred_check_branch
          %344 = sbr.rel (%p342) target = $region64
        $region63: #{fwd.1} parent=55 // pred_region
          %345 = dma.done [#allocation6], 2048
        $region64: #{fwd.1} parent=55 // pred_fallthru
          _
        // Predicated region
        $region65: #{fwd.1} parent=55 // pred_check
          %p346 = pneg %p194
        $region66: #{fwd.1} parent=55 // pred_check_branch
          %348 = sbr.rel (%p346) target = $region68
        $region67: #{fwd.1} parent=55 // pred_region
          %349 = dma.done [#allocation6], 2048
        $region68: #{fwd.1} parent=55 // pred_fallthru
          _
        // Predicated region
        $region69: #{fwd.1} parent=55 // pred_check
          %p350 = pneg %p215
        $region70: #{fwd.1} parent=55 // pred_check_branch
          %352 = sbr.rel (%p350) target = $region72
        $region71: #{fwd.1} parent=55 // pred_region
          %353 = dma.done [#allocation9], 2048
        $region72: #{fwd.1} parent=55 // pred_fallthru
          _
        %p354 = scmp.lt.s32.totalorder %s26, 1
        %s355 = scalar_select %p354, %s26, 1
        %s356 = smul.addr %s355, 8
        %s357 = scalar_lea.vmem %s0, %s356
        %p358 = pneg %p47
        %p359 = pneg %p44
        %p360 = pneg %p68
        %p361 = pneg %p65
        %p362 = pneg %p89
        %p363 = pneg %p86
        %p364 = pneg %p110
        %p365 = pneg %p107
        %p366 = pneg %p131
        %p367 = pneg %p128
        %p368 = pneg %p152
        %p369 = pneg %p149
        %p370 = pneg %p173
        %p371 = pneg %p170
        %p372 = pneg %p194
        %p373 = pneg %p191
        %p374 = pneg %p215
        %p375 = pneg %p212
        %p376 = pneg %p241
        %p377 = pneg %p238
        %s378 = sand.u32 %s228, 1
        %s379 = scalar_lea.sflag [#allocation4], %s378
        %s380 = sand.u32 %s228, 1
        %s381 = smul.addr %s380, 8
        %s382 = scalar_lea.vmem [#allocation10], %s381
        %p383 = scmp.lt.s32.totalorder %s26, 1
        %s384 = scalar_select %p383, %s26, 1
        %s385 = smul.addr %s384, 8
        %s386 = scalar_lea.vmem %s0, %s385
        %v387 = vld [vmem:[%s386] sm:$0xff]
        %v388 = vld [vmem:[%s1] sm:$0xf]
        %v389 = vld [vmem:[%s2] sm:$0x1]
        %v391 = vlaneseq
        %v392 = vshrl.u32 %v391, 7
        %v393 = vsub.s32 0, %v392
        %v394 = vrot.slane %v389, %v393
        %vm396 = vcmask 31744
        %v398 = vsel %vm396, %v387, 0
        %vm400 = vcmask 1043456
        %v402 = vsel %vm400, %v388, 0
        %404 = vmatprep.subr.mxu0 0.0
        %405 = vmatpush1.msra.mxu0 0.0
        %406 = vmatprep.subr.mxu0 0.0
        %407 = vmatpush1.msra.mxu0 0.0
        %408 = vmatprep.subr.mxu0 0.0
        %409 = vmatpush1.msra.mxu0 0.0
        %410 = vmatprep.subr.mxu0 0.0
        %411 = vmatpush1.msra.mxu0 0.0
        %412 = vmatprep.subr.mxu0 0.0
        %413 = vmatpush1.msra.mxu0 0.0
        %414 = vmatprep.subr.mxu0 0.0
        %415 = vmatpush1.msra.mxu0 0.0
        %416 = vmatprep.subr.mxu0 0.0
        %417 = vmatpush1.msra.mxu0 0.0
        %418 = vmatprep.subr.mxu0 0.0
        %419 = vmatpush1.msra.mxu0 0.0
        %420 = vmatprep.subr.mxu0 0.0
        %421 = vmatpush1.msra.mxu0 0.0
        %422 = vmatprep.subr.mxu0 0.0
        %423 = vmatpush1.msra.mxu0 0.0
        %424 = vmatprep.subr.mxu0 0.0
        %425 = vmatpush1.msra.mxu0 0.0
        %426 = vmatprep.subr.mxu0 0.0
        %427 = vmatpush1.msra.mxu0 0.0
        %428 = vmatprep.subr.mxu0 0.0
        %429 = vmatpush1.msra.mxu0 0.0
        %430 = vmatprep.subr.mxu0 0.0
        %431 = vmatpush1.msra.mxu0 0.0
        %432 = vmatprep.subr.mxu0 0.0
        %433 = vmatpush1.msra.mxu0 0.0
        %434 = vmatprep.subr.mxu0 0.0
        %435 = vmatpush1.msra.mxu0 %v402
        %436 = vmatprep.subr.mxu0 0.0
        %437 = vmatpush2.msra.mxu0 0.0
        %438 = vmatprep.subr.mxu0 0.0
        %439 = vmatpush2.msra.mxu0 0.0
        %440 = vmatprep.subr.mxu0 0.0
        %441 = vmatpush2.msra.mxu0 0.0
        %442 = vmatprep.subr.mxu0 0.0
        %443 = vmatpush2.msra.mxu0 0.0
        %444 = vmatprep.subr.mxu0 0.0
        %445 = vmatpush2.msra.mxu0 0.0
        %446 = vmatprep.subr.mxu0 0.0
        %447 = vmatpush2.msra.mxu0 0.0
        %448 = vmatprep.subr.mxu0 0.0
        %449 = vmatpush2.msra.mxu0 0.0
        %450 = vmatprep.subr.mxu0 0.0
        %451 = vmatpush2.msra.mxu0 0.0
        %452 = vmatprep.subr.mxu0 0.0
        %453 = vmatpush2.msra.mxu0 0.0
        %454 = vmatprep.subr.mxu0 0.0
        %455 = vmatpush2.msra.mxu0 0.0
        %456 = vmatprep.subr.mxu0 0.0
        %457 = vmatpush2.msra.mxu0 0.0
        %458 = vmatprep.subr.mxu0 0.0
        %459 = vmatpush2.msra.mxu0 0.0
        %460 = vmatprep.subr.mxu0 0.0
        %461 = vmatpush2.msra.mxu0 0.0
        %462 = vmatprep.subr.mxu0 0.0
        %463 = vmatpush2.msra.mxu0 0.0
        %464 = vmatprep.subr.mxu0 0.0
        %465 = vmatpush2.msra.mxu0 0.0
        %466 = vmatprep.subr.mxu0 0.0
        %467 = vmatpush2.msra.mxu0 0.0
        %468 = vmatprep.mubr.f32.mxu0 0.0
        %469 = vmatmul.mubr.f32.gmra.mxu0 %v398
        %v470 = vpop.f32.mrf.mxu0
        %v471 = vadd.f32 %v394, %v470
        %v472 = vpop.f32.mrf.mxu0
        %473 = vdwg.mxu0
        %v474 = vmax.f32 %v471, 0.0
        %v475 = vld [vmem:[#allocation2] sm:$0xff]
        %v476 = vld [vmem:[#allocation2 + $0x8] sm:$0xff]
        %v477 = vld [vmem:[#allocation2 + $0x10] sm:$0xff]
        %v478 = vld [vmem:[#allocation2 + $0x18] sm:$0xff]
        %v479 = vld [vmem:[#allocation2 + $0x20] sm:$0xff]
        %v480 = vld [vmem:[#allocation2 + $0x28] sm:$0xff]
        %v481 = vld [vmem:[#allocation2 + $0x30] sm:$0xff]
        %v482 = vld [vmem:[#allocation2 + $0x38] sm:$0xff]
        %v483 = vld [vmem:[#allocation2 + $0x40] sm:$0xff]
        %v484 = vld [vmem:[#allocation2 + $0x48] sm:$0xff]
        %v485 = vld [vmem:[#allocation2 + $0x50] sm:$0xff]
        %v486 = vld [vmem:[#allocation2 + $0x58] sm:$0xff]
        %v487 = vld [vmem:[#allocation2 + $0x60] sm:$0xff]
        %v488 = vld [vmem:[#allocation2 + $0x68] sm:$0xff]
        %v489 = vld [vmem:[#allocation2 + $0x70] sm:$0xff]
        %v490 = vld [vmem:[#allocation2 + $0x78] sm:$0xff]
        %v491 = vld [vmem:[%s4] sm:$0x1]
        %v493 = vlaneseq
        %v494 = vshrl.u32 %v493, 7
        %v495 = vsub.s32 0, %v494
        %v496 = vrot.slane %v491, %v495
        %498 = vmatprep.subr.mxu0 0.0
        %499 = vmatpush1.msra.mxu0 %v490
        %500 = vmatprep.subr.mxu0 0.0
        %501 = vmatpush1.msra.mxu0 %v489
        %502 = vmatprep.subr.mxu0 0.0
        %503 = vmatpush1.msra.mxu0 %v488
        %504 = vmatprep.subr.mxu0 0.0
        %505 = vmatpush1.msra.mxu0 %v487
        %506 = vmatprep.subr.mxu0 0.0
        %507 = vmatpush1.msra.mxu0 %v486
        %508 = vmatprep.subr.mxu0 0.0
        %509 = vmatpush1.msra.mxu0 %v485
        %510 = vmatprep.subr.mxu0 0.0
        %511 = vmatpush1.msra.mxu0 %v484
        %512 = vmatprep.subr.mxu0 0.0
        %513 = vmatpush1.msra.mxu0 %v483
        %514 = vmatprep.subr.mxu0 0.0
        %515 = vmatpush1.msra.mxu0 %v482
        %516 = vmatprep.subr.mxu0 0.0
        %517 = vmatpush1.msra.mxu0 %v481
        %518 = vmatprep.subr.mxu0 0.0
        %519 = vmatpush1.msra.mxu0 %v480
        %520 = vmatprep.subr.mxu0 0.0
        %521 = vmatpush1.msra.mxu0 %v479
        %522 = vmatprep.subr.mxu0 0.0
        %523 = vmatpush1.msra.mxu0 %v478
        %524 = vmatprep.subr.mxu0 0.0
        %525 = vmatpush1.msra.mxu0 %v477
        %526 = vmatprep.subr.mxu0 0.0
        %527 = vmatpush1.msra.mxu0 %v476
        %528 = vmatprep.subr.mxu0 0.0
        %529 = vmatpush1.msra.mxu0 %v475
        %530 = vmatprep.subr.mxu0 0.0
        %531 = vmatpush2.msra.mxu0 0.0
        %532 = vmatprep.subr.mxu0 0.0
        %533 = vmatpush2.msra.mxu0 0.0
        %534 = vmatprep.subr.mxu0 0.0
        %535 = vmatpush2.msra.mxu0 0.0
        %536 = vmatprep.subr.mxu0 0.0
        %537 = vmatpush2.msra.mxu0 0.0
        %538 = vmatprep.subr.mxu0 0.0
        %539 = vmatpush2.msra.mxu0 0.0
        %540 = vmatprep.subr.mxu0 0.0
        %541 = vmatpush2.msra.mxu0 0.0
        %542 = vmatprep.subr.mxu0 0.0
        %543 = vmatpush2.msra.mxu0 0.0
        %544 = vmatprep.subr.mxu0 0.0
        %545 = vmatpush2.msra.mxu0 0.0
        %546 = vmatprep.subr.mxu0 0.0
        %547 = vmatpush2.msra.mxu0 0.0
        %548 = vmatprep.subr.mxu0 0.0
        %549 = vmatpush2.msra.mxu0 0.0
        %550 = vmatprep.subr.mxu0 0.0
        %551 = vmatpush2.msra.mxu0 0.0
        %552 = vmatprep.subr.mxu0 0.0
        %553 = vmatpush2.msra.mxu0 0.0
        %554 = vmatprep.subr.mxu0 0.0
        %555 = vmatpush2.msra.mxu0 0.0
        %556 = vmatprep.subr.mxu0 0.0
        %557 = vmatpush2.msra.mxu0 0.0
        %558 = vmatprep.subr.mxu0 0.0
        %559 = vmatpush2.msra.mxu0 0.0
        %560 = vmatprep.subr.mxu0 0.0
        %561 = vmatpush2.msra.mxu0 0.0
        %562 = vmatprep.mubr.f32.mxu0 0.0
        %563 = vmatmul.mubr.f32.gmra.mxu0 %v474
        %v564 = vpop.f32.mrf.mxu0
        %v565 = vadd.f32 %v496, %v564
        %v566 = vpop.f32.mrf.mxu0
        %567 = vdwg.mxu0
        %v568 = vld [vmem:[#allocation5] sm:$0xff]
        %v569 = vld [vmem:[#allocation5 + $0x8] sm:$0xff]
        %v570 = vld [vmem:[#allocation5 + $0x10] sm:$0xff]
        %v571 = vld [vmem:[#allocation5 + $0x18] sm:$0xff]
        %v572 = vld [vmem:[#allocation5 + $0x20] sm:$0xff]
        %v573 = vld [vmem:[#allocation5 + $0x28] sm:$0xff]
        %v574 = vld [vmem:[#allocation5 + $0x30] sm:$0xff]
        %v575 = vld [vmem:[#allocation5 + $0x38] sm:$0xff]
        %v576 = vld [vmem:[#allocation5 + $0x40] sm:$0xff]
        %v577 = vld [vmem:[#allocation5 + $0x48] sm:$0xff]
        %v578 = vld [vmem:[#allocation5 + $0x50] sm:$0xff]
        %v579 = vld [vmem:[#allocation5 + $0x58] sm:$0xff]
        %v580 = vld [vmem:[#allocation5 + $0x60] sm:$0xff]
        %v581 = vld [vmem:[#allocation5 + $0x68] sm:$0xff]
        %v582 = vld [vmem:[#allocation5 + $0x70] sm:$0xff]
        %v583 = vld [vmem:[#allocation5 + $0x78] sm:$0xff]
        %v584 = vld [vmem:[%s6] sm:$0x1]
        %v586 = vlaneseq
        %v587 = vshrl.u32 %v586, 7
        %v588 = vsub.s32 0, %v587
        %v589 = vrot.slane %v584, %v588
        %591 = vmatprep.subr.mxu0 0.0
        %592 = vmatpush1.msra.mxu0 %v583
        %593 = vmatprep.subr.mxu0 0.0
        %594 = vmatpush1.msra.mxu0 %v582
        %595 = vmatprep.subr.mxu0 0.0
        %596 = vmatpush1.msra.mxu0 %v581
        %597 = vmatprep.subr.mxu0 0.0
        %598 = vmatpush1.msra.mxu0 %v580
        %599 = vmatprep.subr.mxu0 0.0
        %600 = vmatpush1.msra.mxu0 %v579
        %601 = vmatprep.subr.mxu0 0.0
        %602 = vmatpush1.msra.mxu0 %v578
        %603 = vmatprep.subr.mxu0 0.0
        %604 = vmatpush1.msra.mxu0 %v577
        %605 = vmatprep.subr.mxu0 0.0
        %606 = vmatpush1.msra.mxu0 %v576
        %607 = vmatprep.subr.mxu0 0.0
        %608 = vmatpush1.msra.mxu0 %v575
        %609 = vmatprep.subr.mxu0 0.0
        %610 = vmatpush1.msra.mxu0 %v574
        %611 = vmatprep.subr.mxu0 0.0
        %612 = vmatpush1.msra.mxu0 %v573
        %613 = vmatprep.subr.mxu0 0.0
        %614 = vmatpush1.msra.mxu0 %v572
        %615 = vmatprep.subr.mxu0 0.0
        %616 = vmatpush1.msra.mxu0 %v571
        %617 = vmatprep.subr.mxu0 0.0
        %618 = vmatpush1.msra.mxu0 %v570
        %619 = vmatprep.subr.mxu0 0.0
        %620 = vmatpush1.msra.mxu0 %v569
        %621 = vmatprep.subr.mxu0 0.0
        %622 = vmatpush1.msra.mxu0 %v568
        %623 = vmatprep.subr.mxu0 0.0
        %624 = vmatpush2.msra.mxu0 0.0
        %625 = vmatprep.subr.mxu0 0.0
        %626 = vmatpush2.msra.mxu0 0.0
        %627 = vmatprep.subr.mxu0 0.0
        %628 = vmatpush2.msra.mxu0 0.0
        %629 = vmatprep.subr.mxu0 0.0
        %630 = vmatpush2.msra.mxu0 0.0
        %631 = vmatprep.subr.mxu0 0.0
        %632 = vmatpush2.msra.mxu0 0.0
        %633 = vmatprep.subr.mxu0 0.0
        %634 = vmatpush2.msra.mxu0 0.0
        %635 = vmatprep.subr.mxu0 0.0
        %636 = vmatpush2.msra.mxu0 0.0
        %637 = vmatprep.subr.mxu0 0.0
        %638 = vmatpush2.msra.mxu0 0.0
        %639 = vmatprep.subr.mxu0 0.0
        %640 = vmatpush2.msra.mxu0 0.0
        %641 = vmatprep.subr.mxu0 0.0
        %642 = vmatpush2.msra.mxu0 0.0
        %643 = vmatprep.subr.mxu0 0.0
        %644 = vmatpush2.msra.mxu0 0.0
        %645 = vmatprep.subr.mxu0 0.0
        %646 = vmatpush2.msra.mxu0 0.0
        %647 = vmatprep.subr.mxu0 0.0
        %648 = vmatpush2.msra.mxu0 0.0
        %649 = vmatprep.subr.mxu0 0.0
        %650 = vmatpush2.msra.mxu0 0.0
        %651 = vmatprep.subr.mxu0 0.0
        %652 = vmatpush2.msra.mxu0 0.0
        %653 = vmatprep.subr.mxu0 0.0
        %654 = vmatpush2.msra.mxu0 0.0
        %655 = vmatprep.mubr.f32.mxu0 0.0
        %656 = vmatmul.mubr.f32.gmra.mxu0 %v565
        %v657 = vpop.f32.mrf.mxu0
        %v658 = vadd.f32 %v589, %v657
        %v659 = vpop.f32.mrf.mxu0
        %660 = vdwg.mxu0
        %661 = vmax.xlane.f32.xlu0 %v658
        %v662 = vpop.xlane.xlu0 %661
        %v663 = vsub.f32 %v658, %v662
        %v664 = vmul.f32 %v663, 1.442695
        %v665 = vpow.pop %v664
        %666 = vadd.xlane.f32.xlu0 %v665
        %v667 = vpop.xlane.xlu0 %666
        %v668 = vrcp.pop %v667
        %v669 = vmul.f32 %v667, %v668
        %v670 = vsub.f32 2.0, %v669
        %v671 = vmul.f32 %v668, %v670
        %v672 = vmul.f32 %v665, %v671
        %v673 = vld [vmem:[#allocation7] sm:$0xff]
        %v674 = vld [vmem:[#allocation7 + $0x8] sm:$0xff]
        %v675 = vld [vmem:[#allocation7 + $0x10] sm:$0xff]
        %v676 = vld [vmem:[#allocation7 + $0x18] sm:$0xff]
        %v677 = vld [vmem:[#allocation7 + $0x20] sm:$0xff]
        %v678 = vld [vmem:[#allocation7 + $0x28] sm:$0xff]
        %v679 = vld [vmem:[#allocation7 + $0x30] sm:$0xff]
        %v680 = vld [vmem:[#allocation7 + $0x38] sm:$0xff]
        %v681 = vld [vmem:[#allocation7 + $0x40] sm:$0xff]
        %v682 = vld [vmem:[#allocation7 + $0x48] sm:$0xff]
        %v683 = vld [vmem:[#allocation7 + $0x50] sm:$0xff]
        %v684 = vld [vmem:[#allocation7 + $0x58] sm:$0xff]
        %v685 = vld [vmem:[#allocation7 + $0x60] sm:$0xff]
        %v686 = vld [vmem:[#allocation7 + $0x68] sm:$0xff]
        %v687 = vld [vmem:[#allocation7 + $0x70] sm:$0xff]
        %v688 = vld [vmem:[#allocation7 + $0x78] sm:$0xff]
        %689 = vmatprep.subr.mxu0 0.0
        %690 = vmatpush1.msra.mxu0 %v688
        %691 = vmatprep.subr.mxu0 0.0
        %692 = vmatpush1.msra.mxu0 %v687
        %693 = vmatprep.subr.mxu0 0.0
        %694 = vmatpush1.msra.mxu0 %v686
        %695 = vmatprep.subr.mxu0 0.0
        %696 = vmatpush1.msra.mxu0 %v685
        %697 = vmatprep.subr.mxu0 0.0
        %698 = vmatpush1.msra.mxu0 %v684
        %699 = vmatprep.subr.mxu0 0.0
        %700 = vmatpush1.msra.mxu0 %v683
        %701 = vmatprep.subr.mxu0 0.0
        %702 = vmatpush1.msra.mxu0 %v682
        %703 = vmatprep.subr.mxu0 0.0
        %704 = vmatpush1.msra.mxu0 %v681
        %705 = vmatprep.subr.mxu0 0.0
        %706 = vmatpush1.msra.mxu0 %v680
        %707 = vmatprep.subr.mxu0 0.0
        %708 = vmatpush1.msra.mxu0 %v679
        %709 = vmatprep.subr.mxu0 0.0
        %710 = vmatpush1.msra.mxu0 %v678
        %711 = vmatprep.subr.mxu0 0.0
        %712 = vmatpush1.msra.mxu0 %v677
        %713 = vmatprep.subr.mxu0 0.0
        %714 = vmatpush1.msra.mxu0 %v676
        %715 = vmatprep.subr.mxu0 0.0
        %716 = vmatpush1.msra.mxu0 %v675
        %717 = vmatprep.subr.mxu0 0.0
        %718 = vmatpush1.msra.mxu0 %v674
        %719 = vmatprep.subr.mxu0 0.0
        %720 = vmatpush1.msra.mxu0 %v673
        %721 = vmatprep.subr.mxu0 0.0
        %722 = vmatpush2.msra.mxu0 0.0
        %723 = vmatprep.subr.mxu0 0.0
        %724 = vmatpush2.msra.mxu0 0.0
        %725 = vmatprep.subr.mxu0 0.0
        %726 = vmatpush2.msra.mxu0 0.0
        %727 = vmatprep.subr.mxu0 0.0
        %728 = vmatpush2.msra.mxu0 0.0
        %729 = vmatprep.subr.mxu0 0.0
        %730 = vmatpush2.msra.mxu0 0.0
        %731 = vmatprep.subr.mxu0 0.0
        %732 = vmatpush2.msra.mxu0 0.0
        %733 = vmatprep.subr.mxu0 0.0
        %734 = vmatpush2.msra.mxu0 0.0
        %735 = vmatprep.subr.mxu0 0.0
        %736 = vmatpush2.msra.mxu0 0.0
        %737 = vmatprep.subr.mxu0 0.0
        %738 = vmatpush2.msra.mxu0 0.0
        %739 = vmatprep.subr.mxu0 0.0
        %740 = vmatpush2.msra.mxu0 0.0
        %741 = vmatprep.subr.mxu0 0.0
        %742 = vmatpush2.msra.mxu0 0.0
        %743 = vmatprep.subr.mxu0 0.0
        %744 = vmatpush2.msra.mxu0 0.0
        %745 = vmatprep.subr.mxu0 0.0
        %746 = vmatpush2.msra.mxu0 0.0
        %747 = vmatprep.subr.mxu0 0.0
        %748 = vmatpush2.msra.mxu0 0.0
        %749 = vmatprep.subr.mxu0 0.0
        %750 = vmatpush2.msra.mxu0 0.0
        %751 = vmatprep.subr.mxu0 0.0
        %752 = vmatpush2.msra.mxu0 0.0
        %753 = vmatprep.mubr.f32.mxu0 0.0
        %754 = vmatmul.mubr.f32.gmra.mxu0 %v672
        %v755 = vpop.f32.mrf.mxu0
        %v756 = vadd.f32 0.0, %v755
        %v757 = vpop.f32.mrf.mxu0
        %758 = vdwg.mxu0
        %v759 = vmul.f32 %v756, %v565
        %v760 = vld [vmem:[#allocation8] sm:$0xff]
        %v761 = vld [vmem:[#allocation8 + $0x8] sm:$0xff]
        %v762 = vld [vmem:[#allocation8 + $0x10] sm:$0xff]
        %v763 = vld [vmem:[#allocation8 + $0x18] sm:$0xff]
        %v764 = vld [vmem:[#allocation8 + $0x20] sm:$0xff]
        %v765 = vld [vmem:[#allocation8 + $0x28] sm:$0xff]
        %v766 = vld [vmem:[#allocation8 + $0x30] sm:$0xff]
        %v767 = vld [vmem:[#allocation8 + $0x38] sm:$0xff]
        %v768 = vld [vmem:[#allocation8 + $0x40] sm:$0xff]
        %v769 = vld [vmem:[#allocation8 + $0x48] sm:$0xff]
        %v770 = vld [vmem:[#allocation8 + $0x50] sm:$0xff]
        %v771 = vld [vmem:[#allocation8 + $0x58] sm:$0xff]
        %v772 = vld [vmem:[#allocation8 + $0x60] sm:$0xff]
        %v773 = vld [vmem:[#allocation8 + $0x68] sm:$0xff]
        %v774 = vld [vmem:[#allocation8 + $0x70] sm:$0xff]
        %v775 = vld [vmem:[#allocation8 + $0x78] sm:$0xff]
        %776 = vmatprep.subr.mxu0 0.0
        %777 = vmatpush1.msra.mxu0 %v775
        %778 = vmatprep.subr.mxu0 0.0
        %779 = vmatpush1.msra.mxu0 %v774
        %780 = vmatprep.subr.mxu0 0.0
        %781 = vmatpush1.msra.mxu0 %v773
        %782 = vmatprep.subr.mxu0 0.0
        %783 = vmatpush1.msra.mxu0 %v772
        %784 = vmatprep.subr.mxu0 0.0
        %785 = vmatpush1.msra.mxu0 %v771
        %786 = vmatprep.subr.mxu0 0.0
        %787 = vmatpush1.msra.mxu0 %v770
        %788 = vmatprep.subr.mxu0 0.0
        %789 = vmatpush1.msra.mxu0 %v769
        %790 = vmatprep.subr.mxu0 0.0
        %791 = vmatpush1.msra.mxu0 %v768
        %792 = vmatprep.subr.mxu0 0.0
        %793 = vmatpush1.msra.mxu0 %v767
        %794 = vmatprep.subr.mxu0 0.0
        %795 = vmatpush1.msra.mxu0 %v766
        %796 = vmatprep.subr.mxu0 0.0
        %797 = vmatpush1.msra.mxu0 %v765
        %798 = vmatprep.subr.mxu0 0.0
        %799 = vmatpush1.msra.mxu0 %v764
        %800 = vmatprep.subr.mxu0 0.0
        %801 = vmatpush1.msra.mxu0 %v763
        %802 = vmatprep.subr.mxu0 0.0
        %803 = vmatpush1.msra.mxu0 %v762
        %804 = vmatprep.subr.mxu0 0.0
        %805 = vmatpush1.msra.mxu0 %v761
        %806 = vmatprep.subr.mxu0 0.0
        %807 = vmatpush1.msra.mxu0 %v760
        %808 = vmatprep.subr.mxu0 0.0
        %809 = vmatpush2.msra.mxu0 0.0
        %810 = vmatprep.subr.mxu0 0.0
        %811 = vmatpush2.msra.mxu0 0.0
        %812 = vmatprep.subr.mxu0 0.0
        %813 = vmatpush2.msra.mxu0 0.0
        %814 = vmatprep.subr.mxu0 0.0
        %815 = vmatpush2.msra.mxu0 0.0
        %816 = vmatprep.subr.mxu0 0.0
        %817 = vmatpush2.msra.mxu0 0.0
        %818 = vmatprep.subr.mxu0 0.0
        %819 = vmatpush2.msra.mxu0 0.0
        %820 = vmatprep.subr.mxu0 0.0
        %821 = vmatpush2.msra.mxu0 0.0
        %822 = vmatprep.subr.mxu0 0.0
        %823 = vmatpush2.msra.mxu0 0.0
        %824 = vmatprep.subr.mxu0 0.0
        %825 = vmatpush2.msra.mxu0 0.0
        %826 = vmatprep.subr.mxu0 0.0
        %827 = vmatpush2.msra.mxu0 0.0
        %828 = vmatprep.subr.mxu0 0.0
        %829 = vmatpush2.msra.mxu0 0.0
        %830 = vmatprep.subr.mxu0 0.0
        %831 = vmatpush2.msra.mxu0 0.0
        %832 = vmatprep.subr.mxu0 0.0
        %833 = vmatpush2.msra.mxu0 0.0
        %834 = vmatprep.subr.mxu0 0.0
        %835 = vmatpush2.msra.mxu0 0.0
        %836 = vmatprep.subr.mxu0 0.0
        %837 = vmatpush2.msra.mxu0 0.0
        %838 = vmatprep.subr.mxu0 0.0
        %839 = vmatpush2.msra.mxu0 0.0
        %840 = vmatprep.mubr.f32.mxu0 0.0
        %841 = vmatmul.mubr.f32.gmra.mxu0 %v759
        %v842 = vpop.f32.mrf.mxu0
        %v843 = vadd.f32 0.0, %v842
        %v844 = vpop.f32.mrf.mxu0
        %845 = vdwg.mxu0
        %vm846 = vcmask 261120
        %847 = vst.msk [vmem:[%s382] sm:$0xff] %vm846, %v843
        %s848 = sand.u32 %s228, 1
        %s849 = scalar_lea.sflag [#allocation4], %s848
        %s850 = sand.u32 %s228, 1
        %s851 = smul.addr %s850, 8
        %s852 = scalar_lea.vmem [#allocation10], %s851
        // Predicated region
        $region73: #{fwd.1} parent=55 // pred_check
          %p853 = pneg %p238
        $region74: #{fwd.1} parent=55 // pred_check_branch
          %855 = sbr.rel (%p853) target = $region76
        $region75: #{fwd.1} parent=55 // pred_region
          %s857 = ssub.s32 128, 128
          %858 = vsyncadd %s849, %s857
          %s859 = smul.addr %s26, 128
          %s860 = scalar_lea.hbm %s9, %s859
          %s862 = sshll.u32 %s852, 4
          %s863 = int_to_ptr.vmem [resolvable:$true] %s862
          %865 = dma.vmem_to_hbm [thread:$0]  %s863, 128, %s860, %s849
        $region76: #{fwd.1} parent=55 // pred_fallthru
          _
      $region56: #{fwd.1} parent=5 // pred_fallthru
        _
      %p866 = scmp.le.s32.totalorder 2, %s21
      // Predicated region
      $region77: #{fwd.1} parent=5 // pred_check
        %p867 = pneg %p866
      $region78: #{fwd.1} parent=5 // pred_check_branch
        %869 = sbr.rel (%p867) target = $region80
      $region79: #{fwd.1} parent=5 // pred_region
        %s870 = ssub.s32 %s21, 2
        // Predicated region
        $region81: #{fwd.1} parent=79 // pred_check
          %p871 = pneg %p244
        $region82: #{fwd.1} parent=79 // pred_check_branch
          %873 = sbr.rel (%p871) target = $region84
        $region83: #{fwd.1} parent=79 // pred_region
          %s874 = sand.u32 %s229, 1
          %s875 = scalar_lea.sflag [#allocation4], %s874
          %s876 = sand.u32 %s229, 1
          %s877 = smul.addr %s876, 8
          %s878 = scalar_lea.vmem [#allocation10], %s877
          %879 = dma.done %s875, 128
        $region84: #{fwd.1} parent=79 // pred_fallthru
          _
      $region80: #{fwd.1} parent=5 // pred_fallthru
        _
    $region6: #{fwd.1} parent=1 // loop_footer
      %s25 = sadd.s32 1, %s21
    $region7: #{fwd.1} parent=1 // loop_footer_branch
      %20 = sbr.rel target = $region3
    $region8: #{fwd.1} parent=1 // loop_exit
      _
    %880 = vsyncpa [#allocation3], 1
    %s881 = scalar_lea.sflag [#allocation3], 1
    %882 = vsyncpa %s881, 1
    %883 = vsyncpa [#allocation6], 1
    %884 = vsyncpa [#allocation9], 1
    %885 = vsyncpa [#allocation4], 1
    %s886 = scalar_lea.sflag [#allocation4], 1
    %887 = vsyncpa %s886, 1

</llo_original>
